<compile_context>
chip_gen: v5e
topology: v5e:2x2
jax: 0.10.0
libtpu: 0.0.40
codegen_flags: <defaults>
</compile_context>

<pallas_src>
import functools
import math

import jax
import jax.numpy as jnp
from jax import lax
from jax.experimental import pallas as pl
from jax.experimental.pallas import tpu as pltpu


def _round_up(a, b):
    return (a + b - 1) // b * b


def _gelu(z, approximate):
    if approximate:
        return jax.nn.gelu(z, approximate=True)          # tanh form -> EUP slot
    # exact erf GELU: matches PyTorch nn.GELU() default
    return 0.5 * z * (1.0 + lax.erf(z * 0.7071067811865476))


# ----------------------------- kernels -----------------------------

def ffn_resident_kernel(x_ref, w1_ref, b1_ref, w2_ref, b2_ref, o_ref, *,
                        approximate_gelu, matmul_dtype):
    # Weights fully VMEM-resident (constant index maps -> DMA'd once); one matmul pair per row tile.
    x = x_ref[...]                                       # (tm, d_model) f32
    z = jnp.dot(x.astype(matmul_dtype), w1_ref[...],
                preferred_element_type=jnp.float32) + b1_ref[...]
    # dropout: inference mode -> identity
    # TODO(synk): training-mode dropout would use pltpu.prng_seed / prng_random_bits.
    z = _gelu(z, approximate_gelu)
    o_ref[...] = (x + b2_ref[...]
                  + jnp.dot(z.astype(matmul_dtype), w2_ref[...],
                            preferred_element_type=jnp.float32)).astype(o_ref.dtype)


def ffn_streaming_kernel(x_ref, w1_ref, b1_ref, w2_ref, b2_ref, o_ref, xcast_ref, *,
                         approximate_gelu, matmul_dtype):
    # d_ff streamed in tk chunks (grid axis 1, 'arbitrary'); partial sums accumulate in the
    # f32 output tile, which is resident across k (same block index).
    k = pl.program_id(1)

    @pl.when(k == 0)
    def _():
        x = x_ref[...]
        xcast_ref[...] = x.astype(matmul_dtype)          # hoisted: cast x once per row tile
        o_ref[...] = x + b2_ref[...]                     # init with residual + bias2 (f32)

    z = jnp.dot(xcast_ref[...], w1_ref[...],
                preferred_element_type=jnp.float32) + b1_ref[...]
    # dropout: inference mode -> identity
    z = _gelu(z, approximate_gelu)
    o_ref[...] += jnp.dot(z.astype(matmul_dtype), w2_ref[...],
                          preferred_element_type=jnp.float32)


# ----------------------------- helpers -----------------------------

def _vmem_budget_bytes():
    cap = 64 * 1024 * 1024            # conservative default (v7x physical per-TC)
    try:
        info = pltpu.get_tpu_info()
        for attr in ("vmem_capacity_bytes", "vmem_bytes", "vmem_size_bytes"):
            v = getattr(info, attr, None)
            if v:
                cap = int(v)
                break
    except Exception:
        pass
    # 75% of physical, capped at 96 MiB  (v5e/v6e: 128 MiB -> 96 MiB; v7x: 64 MiB -> 48 MiB)
    return min(cap * 3 // 4, 96 * 1024 * 1024)


def _pick_tk(dff_pad, tk):
    # largest multiple of 128 that divides dff_pad and is <= tk
    tk = min(_round_up(tk, 128), dff_pad)
    best, t = 128, 128
    while t <= tk:
        if dff_pad % t == 0:
            best = t
        t += 128
    return best


def _resident_vmem_bytes(tm, d_model, dff_pad, wbytes):
    weights = 2 * (d_model * dff_pad + dff_pad * d_model) * wbytes   # 2 pipeline buffers
    biases = 2 * (dff_pad + d_model) * 4
    x_io = 2 * tm * d_model * 4 * 2                                  # x + out, double-buffered f32
    ztmp = tm * dff_pad * 4 + tm * dff_pad * wbytes                  # f32 z + matmul-dtype copy
    return weights + biases + x_io + ztmp + (4 << 20)


def _streaming_vmem_bytes(tm, tk, d_model, wbytes):
    w_tiles = 2 * (d_model * tk + tk * d_model) * wbytes
    biases = 2 * (tk + d_model) * 4
    x_io = 2 * tm * d_model * 4 * 2
    xcast = tm * d_model * wbytes
    ztmp = tm * tk * 4 + tm * tk * wbytes
    return w_tiles + biases + x_io + xcast + ztmp + (4 << 20)


def prepare_ffn_params(w1, b1, w2, b2, *, matmul_dtype=jnp.bfloat16):
    """One-time weight prep (dtype cast + d_ff padding to a multiple of 128).

    Call once outside the hot loop; feed_forward_sublayer takes the prepared arrays
    so no per-call full pass over the weight matrices happens.
    Zero padding of d_ff is exact: gelu(0)=0 meets zero rows of W2.
    """
    d_model, d_ff = w1.shape
    dff_pad = _round_up(d_ff, 128)
    w1c = w1.astype(matmul_dtype)
    w2c = w2.astype(matmul_dtype)
    b1p = b1.astype(jnp.float32)
    if dff_pad != d_ff:
        w1c = jnp.pad(w1c, ((0, 0), (0, dff_pad - d_ff)))
        w2c = jnp.pad(w2c, ((0, dff_pad - d_ff), (0, 0)))
        b1p = jnp.pad(b1p, (0, dff_pad - d_ff))
    # TODO(synk): optional int8 weight quantization (v5e/v6e MXU) would halve weight DMA bytes.
    return (w1c, b1p.reshape(1, dff_pad), w2c,
            b2.astype(jnp.float32).reshape(1, d_model))


# ----------------------------- wrapper -----------------------------

@functools.partial(jax.jit,
                   static_argnames=("tm", "tk", "approximate_gelu", "weights_resident"))
def feed_forward_sublayer(x, w1p, b1p, w2p, b2p, *, tm=1024, tk=1024,
                          approximate_gelu=True, weights_resident=None):
    """x: [B, S, d_model]. w1p/b1p/w2p/b2p from prepare_ffn_params. Returns x's shape/dtype."""
    B, S, d_model = x.shape
    dff_pad = w1p.shape[1]
    matmul_dtype = w1p.dtype
    wbytes = jnp.dtype(matmul_dtype).itemsize
    M = B * S
    budget = _vmem_budget_bytes()

    # row tile: multiple of 8, large for arithmetic intensity, but keep >= 2 row-grid steps
    # when M allows so v7x's two TensorCores both get work.
    rows_min = _round_up(M, 8)
    tm_eff = min(_round_up(tm, 8), rows_min)
    if rows_min >= 16:
        tm_eff = min(tm_eff, _round_up((rows_min + 1) // 2, 8))

    # variant selection: weights-resident when the (conservatively double-buffered) working
    # set fits the per-generation VMEM budget.
    tm_res = min(tm_eff, 512)   # resident variant doesn't need huge tm for intensity
    if weights_resident is None:
        resident = _resident_vmem_bytes(tm_res, d_model, dff_pad, wbytes) <= budget
    else:
        resident = weights_resident

    x2d = x.reshape(M, d_model).astype(jnp.float32)

    if resident:
        tm_eff = tm_res
        m_pad = _round_up(M, tm_eff)
        if m_pad != M:
            x2d = jnp.pad(x2d, ((0, m_pad - M), (0, 0)))
        kernel = functools.partial(ffn_resident_kernel,
                                   approximate_gelu=approximate_gelu,
                                   matmul_dtype=matmul_dtype)
        out2d = pl.pallas_call(
            kernel,
            out_shape=jax.ShapeDtypeStruct((m_pad, d_model), jnp.float32),
            grid_spec=pltpu.PrefetchScalarGridSpec(
                num_scalar_prefetch=0,
                grid=(m_pad // tm_eff,),
                in_specs=[
                    pl.BlockSpec((tm_eff, d_model), lambda i: (i, 0)),    # x row tile
                    pl.BlockSpec((d_model, dff_pad), lambda i: (0, 0)),   # W1 (VMEM-resident)
                    pl.BlockSpec((1, dff_pad), lambda i: (0, 0)),         # b1
                    pl.BlockSpec((dff_pad, d_model), lambda i: (0, 0)),   # W2 (VMEM-resident)
                    pl.BlockSpec((1, d_model), lambda i: (0, 0)),         # b2
                ],
                out_specs=pl.BlockSpec((tm_eff, d_model), lambda i: (i, 0)),
            ),
            compiler_params=pltpu.CompilerParams(
                dimension_semantics=("parallel",),
                vmem_limit_bytes=budget,
            ),
        )(x2d, w1p, b1p, w2p, b2p)
    else:
        tk_eff = _pick_tk(dff_pad, tk)
        # shrink tiles if the working set overshoots the budget (halve tk before tm:
        # tm is the arithmetic-intensity lever in the weight-streaming regime).
        while _streaming_vmem_bytes(tm_eff, tk_eff, d_model, wbytes) > budget:
            if tk_eff > 128:
                tk_eff = _pick_tk(dff_pad, max(128, tk_eff // 2))
            elif tm_eff > 8:
                tm_eff = max(8, _round_up(tm_eff // 2, 8))
            else:
                break
        m_pad = _round_up(M, tm_eff)
        if m_pad != M:
            x2d = jnp.pad(x2d, ((0, m_pad - M), (0, 0)))
        kernel = functools.partial(ffn_streaming_kernel,
                                   approximate_gelu=approximate_gelu,
                                   matmul_dtype=matmul_dtype)
        out2d = pl.pallas_call(
            kernel,
            out_shape=jax.ShapeDtypeStruct((m_pad, d_model), jnp.float32),
            grid_spec=pltpu.PrefetchScalarGridSpec(
                num_scalar_prefetch=0,
                grid=(m_pad // tm_eff, dff_pad // tk_eff),
                in_specs=[
                    pl.BlockSpec((tm_eff, d_model), lambda i, k: (i, 0)),  # x (const over k)
                    pl.BlockSpec((d_model, tk_eff), lambda i, k: (0, k)),  # W1 column tile
                    pl.BlockSpec((1, tk_eff), lambda i, k: (0, k)),        # b1 chunk
                    pl.BlockSpec((tk_eff, d_model), lambda i, k: (k, 0)),  # W2 row tile
                    pl.BlockSpec((1, d_model), lambda i, k: (0, 0)),       # b2
                ],
                out_specs=pl.BlockSpec((tm_eff, d_model), lambda i, k: (i, 0)),
                scratch_shapes=[pltpu.VMEM((tm_eff, d_model), matmul_dtype)],  # cast-once x
            ),
            compiler_params=pltpu.CompilerParams(
                dimension_semantics=("parallel", "arbitrary"),
                vmem_limit_bytes=budget,
            ),
        )(x2d, w1p, b1p, w2p, b2p)

    if m_pad != M:
        out2d = out2d[:M]
    return out2d.reshape(B, S, d_model).astype(x.dtype)


def init_params(key, d_model, d_ff):
    # nn.Linear default init (uniform +-1/sqrt(fan_in)), stored as [in, out].
    k1, k2, k3, k4 = jax.random.split(key, 4)
    bound1 = 1.0 / math.sqrt(d_model)
    bound2 = 1.0 / math.sqrt(d_ff)
    w1 = jax.random.uniform(k1, (d_model, d_ff), jnp.float32, -bound1, bound1)
    b1 = jax.random.uniform(k2, (d_ff,), jnp.float32, -bound1, bound1)
    w2 = jax.random.uniform(k3, (d_ff, d_model), jnp.float32, -bound2, bound2)
    b2 = jax.random.uniform(k4, (d_model,), jnp.float32, -bound2, bound2)
    return w1, b1, w2, b2


if __name__ == "__main__":
    key = jax.random.PRNGKey(0)
    kx, kp = jax.random.split(key)

    batch, seq, d_model, d_ff = 2, 8, 32, 64
    x = jax.random.normal(kx, (batch, seq, d_model), jnp.float32)
    w1, b1, w2, b2 = init_params(kp, d_model, d_ff)

    # Pure-JAX reference (same math as the PyTorch module in eval mode).
    z = x @ w1 + b1
    z = jax.nn.gelu(z, approximate=False)
    ref = x + (z @ w2 + b2)

    # 1) f32 MXU + exact erf GELU, weights-resident (auto at this size): tight semantics check.
    p32 = prepare_ffn_params(w1, b1, w2, b2, matmul_dtype=jnp.float32)
    out_f32 = jax.block_until_ready(
        feed_forward_sublayer(x, *p32, approximate_gelu=False))
    assert jnp.allclose(out_f32, ref, atol=1e-4, rtol=1e-4), "f32 resident path mismatch"

    # 2) Same math, streaming variant forced (exercises the k-reduction kernel).
    out_f32_s = jax.block_until_ready(
        feed_forward_sublayer(x, *p32, approximate_gelu=False, weights_resident=False))
    assert jnp.allclose(out_f32_s, ref, atol=1e-4, rtol=1e-4), "f32 streaming path mismatch"

    # 3) Default fast path: bf16 MXU inputs, f32 accumulation, tanh GELU (resident).
    pbf = prepare_ffn_params(w1, b1, w2, b2)
    out_fast = jax.block_until_ready(feed_forward_sublayer(x, *pbf))
    assert jnp.allclose(out_fast, ref, atol=5e-2, rtol=5e-2), "bf16 resident path mismatch"

    # 4) Fast path, streaming variant forced.
    out_fast_s = jax.block_until_ready(
        feed_forward_sublayer(x, *pbf, weights_resident=False))
    assert jnp.allclose(out_fast_s, ref, atol=5e-2, rtol=5e-2), "bf16 streaming path mismatch"

    print("KERNEL_OK")
</pallas_src>

<mosaic_0001>
module attributes {stable_mosaic.version = 11 : i64} {
  func.func @ffn_resident_kernel(%arg0: i32, %arg1: memref<8x32xf32, #tpu.memory_space<vmem>>, %arg2: memref<32x128xf32, #tpu.memory_space<vmem>>, %arg3: memref<1x128xf32, #tpu.memory_space<vmem>>, %arg4: memref<128x32xf32, #tpu.memory_space<vmem>>, %arg5: memref<1x32xf32, #tpu.memory_space<vmem>>, %arg6: memref<8x32xf32, #tpu.memory_space<vmem>>) attributes {dimension_semantics = [#tpu.dimension_semantics<parallel>], iteration_bounds = array<i64: 2>, scalar_prefetch = 0 : i64, scratch_operands = 0 : i64, tpu.core_type = #tpu.core_type<tc>, window_params = [{transform_indices = @transform_0, window_bounds = array<i64: 8, 32>}, {pipeline_mode = #tpu.pipeline_mode<synchronous>, transform_indices = @transform_1, window_bounds = array<i64: 32, 128>}, {pipeline_mode = #tpu.pipeline_mode<synchronous>, transform_indices = @transform_2, window_bounds = array<i64: 1, 128>}, {pipeline_mode = #tpu.pipeline_mode<synchronous>, transform_indices = @transform_3, window_bounds = array<i64: 128, 32>}, {pipeline_mode = #tpu.pipeline_mode<synchronous>, transform_indices = @transform_4, window_bounds = array<i64: 1, 32>}, {transform_indices = @transform_5, window_bounds = array<i64: 8, 32>}]} {
    %c0 = arith.constant 0 : index
    %c0_0 = arith.constant 0 : index
    %0 = vector.load %arg1[%c0, %c0_0] : memref<8x32xf32, #tpu.memory_space<vmem>>, vector<8x32xf32>
    %c0_1 = arith.constant 0 : index
    %c0_2 = arith.constant 0 : index
    %1 = vector.load %arg2[%c0_1, %c0_2] : memref<32x128xf32, #tpu.memory_space<vmem>>, vector<32x128xf32>
    %cst = arith.constant dense<0.000000e+00> : vector<8x128xf32>
    %2 = tpu.matmul %0, %1, %cst {dimension_numbers = #tpu.dot_dimension_numbers<[1], [0], [0], [1], [0, 0, 1, 1], [], []>} : vector<8x32xf32>, vector<32x128xf32>, vector<8x128xf32> -> vector<8x128xf32>
    %c0_3 = arith.constant 0 : index
    %c0_4 = arith.constant 0 : index
    %3 = vector.load %arg3[%c0_3, %c0_4] : memref<1x128xf32, #tpu.memory_space<vmem>>, vector<1x128xf32>
    %4 = vector.broadcast %3 : vector<1x128xf32> to vector<8x128xf32>
    %5 = arith.addf %2, %4 : vector<8x128xf32>
    %cst_5 = arith.constant 5.000000e-01 : f32
    %6 = vector.broadcast %cst_5 : f32 to vector<8x128xf32>
    %7 = arith.mulf %6, %5 : vector<8x128xf32>
    %cst_6 = arith.constant 0.707106769 : f32
    %8 = vector.broadcast %cst_6 : f32 to vector<8x128xf32>
    %9 = arith.mulf %5, %8 : vector<8x128xf32>
    %10 = math.erf %9 : vector<8x128xf32>
    %cst_7 = arith.constant 1.000000e+00 : f32
    %11 = vector.broadcast %cst_7 : f32 to vector<8x128xf32>
    %12 = arith.addf %11, %10 : vector<8x128xf32>
    %13 = arith.mulf %7, %12 : vector<8x128xf32>
    %c0_8 = arith.constant 0 : index
    %c0_9 = arith.constant 0 : index
    %14 = vector.load %arg5[%c0_8, %c0_9] : memref<1x32xf32, #tpu.memory_space<vmem>>, vector<1x32xf32>
    %15 = vector.broadcast %14 : vector<1x32xf32> to vector<8x32xf32>
    %16 = arith.addf %0, %15 : vector<8x32xf32>
    %c0_10 = arith.constant 0 : index
    %c0_11 = arith.constant 0 : index
    %17 = vector.load %arg4[%c0_10, %c0_11] : memref<128x32xf32, #tpu.memory_space<vmem>>, vector<128x32xf32>
    %cst_12 = arith.constant dense<0.000000e+00> : vector<8x32xf32>
    %18 = tpu.matmul %13, %17, %cst_12 {dimension_numbers = #tpu.dot_dimension_numbers<[1], [0], [0], [1], [0, 0, 1, 1], [], []>} : vector<8x128xf32>, vector<128x32xf32>, vector<8x32xf32> -> vector<8x32xf32>
    %19 = arith.addf %16, %18 : vector<8x32xf32>
    %c0_13 = arith.constant 0 : index
    %c0_14 = arith.constant 0 : index
    %20 = vector.load %arg6[%c0_13, %c0_14] : memref<8x32xf32, #tpu.memory_space<vmem>>, vector<8x32xf32>
    tpu.vector_store %arg6[%c0_13, %c0_14], %19 {strides = array<i32>} : memref<8x32xf32, #tpu.memory_space<vmem>>, vector<8x32xf32>,
    return
  }
  func.func @transform_0(%arg0: i32) -> (i32, i32) {
    %c0_i32 = arith.constant 0 : i32
    %c0_i32_0 = arith.constant 0 : i32
    return %arg0, %c0_i32 : i32, i32
  }
  func.func @transform_1(%arg0: i32) -> (i32, i32) {
    %c0_i32 = arith.constant 0 : i32
    %c0_i32_0 = arith.constant 0 : i32
    %c0_i32_1 = arith.constant 0 : i32
    return %c0_i32, %c0_i32_0 : i32, i32
  }
  func.func @transform_2(%arg0: i32) -> (i32, i32) {
    %c0_i32 = arith.constant 0 : i32
    %c0_i32_0 = arith.constant 0 : i32
    %c0_i32_1 = arith.constant 0 : i32
    return %c0_i32, %c0_i32_0 : i32, i32
  }
  func.func @transform_3(%arg0: i32) -> (i32, i32) {
    %c0_i32 = arith.constant 0 : i32
    %c0_i32_0 = arith.constant 0 : i32
    %c0_i32_1 = arith.constant 0 : i32
    return %c0_i32, %c0_i32_0 : i32, i32
  }
  func.func @transform_4(%arg0: i32) -> (i32, i32) {
    %c0_i32 = arith.constant 0 : i32
    %c0_i32_0 = arith.constant 0 : i32
    %c0_i32_1 = arith.constant 0 : i32
    return %c0_i32, %c0_i32_0 : i32, i32
  }
  func.func @transform_5(%arg0: i32) -> (i32, i32) {
    %c0_i32 = arith.constant 0 : i32
    %c0_i32_0 = arith.constant 0 : i32
    return %arg0, %c0_i32 : i32, i32
  }
}

</mosaic_0001>

<llo_original>
// kernel: feed_forward_sublayer.1
$region0: #{feed_forward_sublayer.1}
  #allocation0 [shape = 'u32[]', space=smem, size = 0x4, offset = 0x4, fixed_abs, tag = 'smem constant byte address 0x4 - core index']
  #allocation1 [shape = 'u32[72,128]{1,0:T(1,128)}', space=vmem, size = 0x9000, scoped, tag = 'internal scratch']
  %s0 = inlined_call_operand.vmem [shape: f32[16,32], index: 0, kind: input, shape index: {}]
  %s1 = inlined_call_operand.vmem [shape: f32[32,128], index: 1, kind: input, shape index: {}]
  %s2 = inlined_call_operand.vmem [shape: f32[1,128], index: 2, kind: input, shape index: {}]
  %s3 = inlined_call_operand.vmem [shape: f32[128,32], index: 3, kind: input, shape index: {}]
  %s4 = inlined_call_operand.vmem [shape: f32[1,32], index: 4, kind: input, shape index: {}]
  %s5 = inlined_call_operand.hbm [shape: f32[16,32], index: 5, kind: output, shape index: {}]
  %s6 = sld [smem:[#allocation0]]
  $region53: #{feed_forward_sublayer.1} parent=0
    _
  %s8 = ssub.s32 1, %s6
  %s9 = scalar_select 0, %s8, %s6
  $region1: #{feed_forward_sublayer.1} parent=0
    #allocation2 [shape = 'u8[8192]{0}', space=vmem, size = 0x2000, scoped, tag = 'output window, operand 0']
    #allocation3 [shape = 's32[2]{0}', space=sflag, size = 0x8, scoped, tag = 'scoped memory for feed_forward_sublayer.1']
    %10 = vsyncpa [#allocation3], 0
    %s11 = scalar_lea.sflag [#allocation3], 1
    %12 = vsyncpa %s11, 0
    loop: start=0, step=1, limit=4
    $region2: #{feed_forward_sublayer.1} parent=1 // loop_pre_header
      _
    $region3: #{feed_forward_sublayer.1} parent=1 // loop_header
      %s14 = sphi 0, %s18
      %p15 = scmp.ge.s32.totalorder %s14, 4
      %s24 = sphi 0, %s26
      %s27 = sphi 0, %s24
      %s28 = sphi 0, %s27
      %s44 = sphi 0, %s28
      %s48 = sphi 0, %s48
      %s50 = sphi 0, %s48
      %s51 = sphi 0, %s50
      %s65 = sphi 0, %s51
      %s69 = sphi 0, %s69
      %s71 = sphi 0, %s69
      %s72 = sphi 0, %s71
      %s86 = sphi 0, %s72
      %s90 = sphi 0, %s90
      %s92 = sphi 0, %s90
      %s93 = sphi 0, %s92
      %s107 = sphi 0, %s93
      %s111 = sphi 0, %s111
      %s113 = sphi 0, %s111
      %s114 = sphi 0, %s113
      %s128 = sphi 0, %s114
      %s134 = sphi 0, %s136
      %s137 = sphi 0, %s134
      %s138 = sphi 0, %s137
      %s154 = sphi 0, %s138
    $region4: #{feed_forward_sublayer.1} parent=1 // loop_header_branch
      %17 = sbr.rel (%p15) target = $region8
    $region5: #{feed_forward_sublayer.1} parent=1 // loop_body
      %s19 = ssub.s32 %s14, 1
      %s20 = ssub.s32 %s14, 2
      %s21 = sadd.s32 %s14, 1
      %s22 = ssub.s32 %s14, %s21
      %p23 = scmp.eq.s32.totalorder %s22, 0
      %s25 = sadd.s32 %s24, 1
      %s26 = scalar_select %p23, %s24, %s25
      %p29 = pneg %p23
      %p30 = scmp.eq.s32.totalorder %s14, 1
      %p31 = por %p29, %p30
      %p32 = scmp.ne.s32.totalorder %s24, %s27
      %p33 = scmp.eq.s32.totalorder %s14, 0
      %p34 = por %p32, %p33
      %p35 = scmp.ne.s32.totalorder %s24, %s27
      %p36 = scmp.eq.s32.totalorder %s19, 1
      %p37 = por %p35, %p36
      %p38 = scmp.ne.s32.totalorder %s27, %s28
      %p39 = scmp.eq.s32.totalorder %s19, 0
      %p40 = por %p38, %p39
      %p41 = scmp.ne.s32.totalorder %s27, %s28
      %p42 = scmp.eq.s32.totalorder %s20, 1
      %p43 = por %p41, %p42
      %p45 = scmp.ne.s32.totalorder %s28, %s44
      %p46 = scmp.eq.s32.totalorder %s20, 0
      %p47 = por %p45, %p46
      %s49 = sadd.s32 %s48, 1
      %p52 = scmp.eq.s32.totalorder %s14, 1
      %p53 = scmp.ne.s32.totalorder %s48, %s50
      %p54 = scmp.eq.s32.totalorder %s14, 0
      %p55 = por %p53, %p54
      %p56 = scmp.ne.s32.totalorder %s48, %s50
      %p57 = scmp.eq.s32.totalorder %s19, 1
      %p58 = por %p56, %p57
      %p59 = scmp.ne.s32.totalorder %s50, %s51
      %p60 = scmp.eq.s32.totalorder %s19, 0
      %p61 = por %p59, %p60
      %p62 = scmp.ne.s32.totalorder %s50, %s51
      %p63 = scmp.eq.s32.totalorder %s20, 1
      %p64 = por %p62, %p63
      %p66 = scmp.ne.s32.totalorder %s51, %s65
      %p67 = scmp.eq.s32.totalorder %s20, 0
      %p68 = por %p66, %p67
      %s70 = sadd.s32 %s69, 1
      %p73 = scmp.eq.s32.totalorder %s14, 1
      %p74 = scmp.ne.s32.totalorder %s69, %s71
      %p75 = scmp.eq.s32.totalorder %s14, 0
      %p76 = por %p74, %p75
      %p77 = scmp.ne.s32.totalorder %s69, %s71
      %p78 = scmp.eq.s32.totalorder %s19, 1
      %p79 = por %p77, %p78
      %p80 = scmp.ne.s32.totalorder %s71, %s72
      %p81 = scmp.eq.s32.totalorder %s19, 0
      %p82 = por %p80, %p81
      %p83 = scmp.ne.s32.totalorder %s71, %s72
      %p84 = scmp.eq.s32.totalorder %s20, 1
      %p85 = por %p83, %p84
      %p87 = scmp.ne.s32.totalorder %s72, %s86
      %p88 = scmp.eq.s32.totalorder %s20, 0
      %p89 = por %p87, %p88
      %s91 = sadd.s32 %s90, 1
      %p94 = scmp.eq.s32.totalorder %s14, 1
      %p95 = scmp.ne.s32.totalorder %s90, %s92
      %p96 = scmp.eq.s32.totalorder %s14, 0
      %p97 = por %p95, %p96
      %p98 = scmp.ne.s32.totalorder %s90, %s92
      %p99 = scmp.eq.s32.totalorder %s19, 1
      %p100 = por %p98, %p99
      %p101 = scmp.ne.s32.totalorder %s92, %s93
      %p102 = scmp.eq.s32.totalorder %s19, 0
      %p103 = por %p101, %p102
      %p104 = scmp.ne.s32.totalorder %s92, %s93
      %p105 = scmp.eq.s32.totalorder %s20, 1
      %p106 = por %p104, %p105
      %p108 = scmp.ne.s32.totalorder %s93, %s107
      %p109 = scmp.eq.s32.totalorder %s20, 0
      %p110 = por %p108, %p109
      %s112 = sadd.s32 %s111, 1
      %p115 = scmp.eq.s32.totalorder %s14, 1
      %p116 = scmp.ne.s32.totalorder %s111, %s113
      %p117 = scmp.eq.s32.totalorder %s14, 0
      %p118 = por %p116, %p117
      %p119 = scmp.ne.s32.totalorder %s111, %s113
      %p120 = scmp.eq.s32.totalorder %s19, 1
      %p121 = por %p119, %p120
      %p122 = scmp.ne.s32.totalorder %s113, %s114
      %p123 = scmp.eq.s32.totalorder %s19, 0
      %p124 = por %p122, %p123
      %p125 = scmp.ne.s32.totalorder %s113, %s114
      %p126 = scmp.eq.s32.totalorder %s20, 1
      %p127 = por %p125, %p126
      %p129 = scmp.ne.s32.totalorder %s114, %s128
      %p130 = scmp.eq.s32.totalorder %s20, 0
      %p131 = por %p129, %p130
      %s132 = ssub.s32 %s14, %s21
      %p133 = scmp.eq.s32.totalorder %s132, 0
      %s135 = sadd.s32 %s134, 1
      %s136 = scalar_select %p133, %s134, %s135
      %p139 = pneg %p133
      %p140 = scmp.eq.s32.totalorder %s14, 1
      %p141 = por %p139, %p140
      %p142 = scmp.ne.s32.totalorder %s134, %s137
      %p143 = scmp.eq.s32.totalorder %s14, 0
      %p144 = por %p142, %p143
      %p145 = scmp.ne.s32.totalorder %s134, %s137
      %p146 = scmp.eq.s32.totalorder %s19, 1
      %p147 = por %p145, %p146
      %p148 = scmp.ne.s32.totalorder %s137, %s138
      %p149 = scmp.eq.s32.totalorder %s19, 0
      %p150 = por %p148, %p149
      %p151 = scmp.ne.s32.totalorder %s137, %s138
      %p152 = scmp.eq.s32.totalorder %s20, 1
      %p153 = por %p151, %p152
      %p155 = scmp.ne.s32.totalorder %s138, %s154
      %p156 = scmp.eq.s32.totalorder %s20, 0
      %p157 = por %p155, %p156
      %p158 = scmp.le.s32.totalorder 1, %s14
      %p159 = scmp.lt.s32.totalorder %s14, 3
      %p160 = pnand %p158, %p159
      %p161 = pneg %p160
      // Predicated region
      $region9: #{feed_forward_sublayer.1} parent=5 // pred_check
        _
      $region10: #{feed_forward_sublayer.1} parent=5 // pred_check_branch
        %163 = sbr.rel (%p160) target = $region12
      $region11: #{feed_forward_sublayer.1} parent=5 // pred_region
        %s164 = ssub.s32 %s14, 1
        // Predicated region
        $region13: #{feed_forward_sublayer.1} parent=11 // pred_check
          %p165 = pneg %p61
        $region14: #{feed_forward_sublayer.1} parent=11 // pred_check_branch
          %167 = sbr.rel (%p165) target = $region16
        $region15: #{feed_forward_sublayer.1} parent=11 // pred_region
          _
        $region16: #{feed_forward_sublayer.1} parent=11 // pred_fallthru
          _
        // Predicated region
        $region17: #{feed_forward_sublayer.1} parent=11 // pred_check
          %p168 = pneg %p82
        $region18: #{feed_forward_sublayer.1} parent=11 // pred_check_branch
          %170 = sbr.rel (%p168) target = $region20
        $region19: #{feed_forward_sublayer.1} parent=11 // pred_region
          _
        $region20: #{feed_forward_sublayer.1} parent=11 // pred_fallthru
          _
        // Predicated region
        $region21: #{feed_forward_sublayer.1} parent=11 // pred_check
          %p171 = pneg %p103
        $region22: #{feed_forward_sublayer.1} parent=11 // pred_check_branch
          %173 = sbr.rel (%p171) target = $region24
        $region23: #{feed_forward_sublayer.1} parent=11 // pred_region
          _
        $region24: #{feed_forward_sublayer.1} parent=11 // pred_fallthru
          _
        // Predicated region
        $region25: #{feed_forward_sublayer.1} parent=11 // pred_check
          %p174 = pneg %p124
        $region26: #{feed_forward_sublayer.1} parent=11 // pred_check_branch
          %176 = sbr.rel (%p174) target = $region28
        $region27: #{feed_forward_sublayer.1} parent=11 // pred_region
          _
        $region28: #{feed_forward_sublayer.1} parent=11 // pred_fallthru
          _
      $region12: #{feed_forward_sublayer.1} parent=5 // pred_fallthru
        _
      %p177 = scmp.lt.s32.totalorder %s14, 2
      // Predicated region
      $region29: #{feed_forward_sublayer.1} parent=5 // pred_check
        %p178 = pneg %p177
      $region30: #{feed_forward_sublayer.1} parent=5 // pred_check_branch
        %180 = sbr.rel (%p178) target = $region32
      $region31: #{feed_forward_sublayer.1} parent=5 // pred_region
        // Predicated region
        $region33: #{feed_forward_sublayer.1} parent=31 // pred_check
          %p181 = pneg %p34
        $region34: #{feed_forward_sublayer.1} parent=31 // pred_check_branch
          %183 = sbr.rel (%p181) target = $region36
        $region35: #{feed_forward_sublayer.1} parent=31 // pred_region
          %p184 = scmp.lt.s32.totalorder %s14, 1
          %s185 = scalar_select %p184, %s14, 1
          %s186 = smul.addr %s185, 8
          %s187 = scalar_lea.vmem %s0, %s186
        $region36: #{feed_forward_sublayer.1} parent=31 // pred_fallthru
          _
      $region32: #{feed_forward_sublayer.1} parent=5 // pred_fallthru
        _
      %p188 = scmp.le.s32.totalorder 1, %s14
      %p189 = scmp.lt.s32.totalorder %s14, 3
      %p190 = pnand %p188, %p189
      %p191 = pneg %p190
      // Predicated region
      $region37: #{feed_forward_sublayer.1} parent=5 // pred_check
        _
      $region38: #{feed_forward_sublayer.1} parent=5 // pred_check_branch
        %193 = sbr.rel (%p190) target = $region40
      $region39: #{feed_forward_sublayer.1} parent=5 // pred_region
        %s194 = ssub.s32 %s14, 1
        %p195 = scmp.lt.s32.totalorder %s19, 1
        %s196 = scalar_select %p195, %s19, 1
        %s197 = smul.addr %s196, 8
        %s198 = scalar_lea.vmem %s0, %s197
        %p199 = pneg %p40
        %p200 = pneg %p37
        %p201 = pneg %p61
        %p202 = pneg %p58
        %p203 = pneg %p82
        %p204 = pneg %p79
        %p205 = pneg %p103
        %p206 = pneg %p100
        %p207 = pneg %p124
        %p208 = pneg %p121
        %p209 = pneg %p150
        %p210 = pneg %p147
        %s211 = sand.u32 %s137, 1
        %s212 = scalar_lea.sflag [#allocation3], %s211
        %s213 = sand.u32 %s137, 1
        %s214 = smul.addr %s213, 8
        %s215 = scalar_lea.vmem [#allocation2], %s214
        %p216 = scmp.lt.s32.totalorder %s19, 1
        %s217 = scalar_select %p216, %s19, 1
        %s218 = smul.addr %s217, 8
        %s219 = scalar_lea.vmem %s0, %s218
        %v220 = vld [vmem:[%s219] sm:$0xff]
        %v221 = vld [vmem:[%s1] sm:$0xff]
        %v222 = vld [vmem:[%s1 + $0x8] sm:$0xff]
        %v223 = vld [vmem:[%s1 + $0x10] sm:$0xff]
        %v224 = vld [vmem:[%s1 + $0x18] sm:$0xff]
        %v225 = vld [vmem:[%s2] sm:$0x1]
        %v227 = vperm.slane %v225, 0
        %vm229 = vcmask 261120
        %v231 = vsel %vm229, %v220, 0
        %233 = vmatpush.msra.mxu0 0.0
        %234 = vmatpush.msra.mxu0 0.0
        %235 = vmatpush.msra.mxu0 0.0
        %236 = vmatpush.msra.mxu0 0.0
        %237 = vmatpush.msra.mxu0 0.0
        %238 = vmatpush.msra.mxu0 0.0
        %239 = vmatpush.msra.mxu0 0.0
        %240 = vmatpush.msra.mxu0 0.0
        %241 = vmatpush.msra.mxu0 0.0
        %242 = vmatpush.msra.mxu0 0.0
        %243 = vmatpush.msra.mxu0 0.0
        %244 = vmatpush.msra.mxu0 0.0
        %245 = vmatpush.msra.mxu0 %v224
        %246 = vmatpush.msra.mxu0 %v223
        %247 = vmatpush.msra.mxu0 %v222
        %248 = vmatpush.msra.mxu0 %v221
        %249 = vmatmul.f32.gmra.mxu0 %v231
        %v250 = vpop.f32.mrf.mxu0
        %v251 = vadd.f32 %v227, %v250
        %252 = vdwg.mxu0
        %v253 = vmul.f32 %v251, 0.5
        %v254 = vmul.f32 %v251, 0.70710677
        %v255 = vmul.f32 %v254, %v254
        %v256 = vmin.f32 16.0, %v255
        %v257 = vmul.f32 %v256, 2.1237322e-06
        %v258 = vadd.f32 %v257, 0.00028619796
        %v259 = vmul.f32 %v256, %v258
        %v260 = vadd.f32 %v259, 0.0036580483
        %v261 = vmul.f32 %v256, %v260
        %v262 = vadd.f32 %v261, 0.05243302
        %v263 = vmul.f32 %v256, %v262
        %v264 = vadd.f32 %v263, 0.18741608
        %v265 = vmul.f32 %v256, %v264
        %v266 = vadd.f32 %v265, 1.1283791
        %v267 = vmul.f32 %v254, %v266
        %v268 = vmul.f32 %v256, 3.8918573e-05
        %v269 = vadd.f32 %v268, 0.001143296
        %v270 = vmul.f32 %v256, %v269
        %v271 = vadd.f32 %v270, 0.014752088
        %v272 = vmul.f32 %v256, %v271
        %v273 = vadd.f32 %v272, 0.112945676
        %v274 = vmul.f32 %v256, %v273
        %v275 = vadd.f32 %v274, 0.4994258
        %v276 = vmul.f32 %v256, %v275
        %v277 = vadd.f32 %v276, 1.0
        %v278 = vrcp.pop %v277
        %v279 = vmul.f32 %v277, %v278
        %v280 = vsub.f32 1.0, %v279
        %v281 = vmul.f32 %v278, %v280
        %v282 = vadd.f32 %v278, %v281
        %vm283 = vweird.f32 %v277
        %vm284 = vweird.f32 %v278
        %vm285 = vmor %vm283, %vm284
        %v286 = vsel %vm285, %v278, %v282
        %v287 = vand.u32 2147483647, %v277
        %vm288 = vcmp.eq.f32.partialorder %v287, 8.507059e+37
        %v289 = vand.u32 %v277, 2147483648
        %v290 = vor.u32 1.1754944e-38, %v289
        %v291 = vsel %vm288, %v290, %v286
        %v292 = vmul.f32 %v267, %v291
        %v293 = vmin.f32 %v292, 1.0
        %v294 = vmax.f32 %v293, -1.0
        %v295 = vadd.f32 %v294, 1.0
        %v296 = vmul.f32 %v253, %v295
        %v297 = vld [vmem:[%s4] sm:$0x1]
        %v299 = vperm.slane %v297, 0
        %v301 = vadd.f32 %v220, %v299
        %v302 = vld [vmem:[%s3] sm:$0xff]
        %v303 = vld [vmem:[%s3 + $0x8] sm:$0xff]
        %v304 = vld [vmem:[%s3 + $0x10] sm:$0xff]
        %v305 = vld [vmem:[%s3 + $0x18] sm:$0xff]
        %v306 = vld [vmem:[%s3 + $0x20] sm:$0xff]
        %v307 = vld [vmem:[%s3 + $0x28] sm:$0xff]
        %v308 = vld [vmem:[%s3 + $0x30] sm:$0xff]
        %v309 = vld [vmem:[%s3 + $0x38] sm:$0xff]
        %v310 = vld [vmem:[%s3 + $0x40] sm:$0xff]
        %v311 = vld [vmem:[%s3 + $0x48] sm:$0xff]
        %v312 = vld [vmem:[%s3 + $0x50] sm:$0xff]
        %v313 = vld [vmem:[%s3 + $0x58] sm:$0xff]
        %v314 = vld [vmem:[%s3 + $0x60] sm:$0xff]
        %v315 = vld [vmem:[%s3 + $0x68] sm:$0xff]
        %v316 = vld [vmem:[%s3 + $0x70] sm:$0xff]
        %v317 = vld [vmem:[%s3 + $0x78] sm:$0xff]
        %318 = vmatpush.msra.mxu0 %v317
        %319 = vmatpush.msra.mxu0 %v316
        %320 = vmatpush.msra.mxu0 %v315
        %321 = vmatpush.msra.mxu0 %v314
        %322 = vmatpush.msra.mxu0 %v313
        %323 = vmatpush.msra.mxu0 %v312
        %324 = vmatpush.msra.mxu0 %v311
        %325 = vmatpush.msra.mxu0 %v310
        %326 = vmatpush.msra.mxu0 %v309
        %327 = vmatpush.msra.mxu0 %v308
        %328 = vmatpush.msra.mxu0 %v307
        %329 = vmatpush.msra.mxu0 %v306
        %330 = vmatpush.msra.mxu0 %v305
        %331 = vmatpush.msra.mxu0 %v304
        %332 = vmatpush.msra.mxu0 %v303
        %333 = vmatpush.msra.mxu0 %v302
        %334 = vmatmul.f32.gmra.mxu0 %v296
        %v335 = vpop.f32.mrf.mxu0
        %v336 = vadd.f32 0.0, %v335
        %337 = vdwg.mxu0
        %v338 = vadd.f32 %v301, %v336
        %339 = vst.msk [vmem:[%s215] sm:$0xff] %vm229, %v338
        %s340 = sand.u32 %s137, 1
        %s341 = scalar_lea.sflag [#allocation3], %s340
        %s342 = sand.u32 %s137, 1
        %s343 = smul.addr %s342, 8
        %s344 = scalar_lea.vmem [#allocation2], %s343
        // Predicated region
        $region41: #{feed_forward_sublayer.1} parent=39 // pred_check
          %p345 = pneg %p147
        $region42: #{feed_forward_sublayer.1} parent=39 // pred_check_branch
          %347 = sbr.rel (%p345) target = $region44
        $region43: #{feed_forward_sublayer.1} parent=39 // pred_region
          %349 = vsyncadd %s341, 0
          %s350 = smul.addr %s19, 8
          %s351 = scalar_lea.hbm %s5, %s350
          %s353 = sshll.u32 %s344, 4
          %s354 = int_to_ptr.vmem [resolvable:$true] %s353
          %s355 = sshll.u32 %s351, 4
          %s356 = int_to_ptr.hbm [resolvable:$true] %s355
          %358 = dma.vmem_to_hbm [thread:$0]  %s354, 128, %s356, %s341
        $region44: #{feed_forward_sublayer.1} parent=39 // pred_fallthru
          _
      $region40: #{feed_forward_sublayer.1} parent=5 // pred_fallthru
        _
      %p359 = scmp.le.s32.totalorder 2, %s14
      // Predicated region
      $region45: #{feed_forward_sublayer.1} parent=5 // pred_check
        %p360 = pneg %p359
      $region46: #{feed_forward_sublayer.1} parent=5 // pred_check_branch
        %362 = sbr.rel (%p360) target = $region48
      $region47: #{feed_forward_sublayer.1} parent=5 // pred_region
        %s363 = ssub.s32 %s14, 2
        // Predicated region
        $region49: #{feed_forward_sublayer.1} parent=47 // pred_check
          %p364 = pneg %p153
        $region50: #{feed_forward_sublayer.1} parent=47 // pred_check_branch
          %366 = sbr.rel (%p364) target = $region52
        $region51: #{feed_forward_sublayer.1} parent=47 // pred_region
          %s367 = sand.u32 %s138, 1
          %s368 = scalar_lea.sflag [#allocation3], %s367
          %s369 = sand.u32 %s138, 1
          %s370 = smul.addr %s369, 8
          %s371 = scalar_lea.vmem [#allocation2], %s370
          %373 = dma.done %s368, 128
        $region52: #{feed_forward_sublayer.1} parent=47 // pred_fallthru
          _
      $region48: #{feed_forward_sublayer.1} parent=5 // pred_fallthru
        _
    $region6: #{feed_forward_sublayer.1} parent=1 // loop_footer
      %s18 = sadd.s32 1, %s14
    $region7: #{feed_forward_sublayer.1} parent=1 // loop_footer_branch
      %13 = sbr.rel target = $region3
    $region8: #{feed_forward_sublayer.1} parent=1 // loop_exit
      _
    %374 = vsyncpa [#allocation3], 1
    %s375 = scalar_lea.sflag [#allocation3], 1
    %376 = vsyncpa %s375, 1

</llo_original>
